<compile_context>
chip_gen: v5e
topology: v5e:2x2
jax: 0.10.0
libtpu: 0.0.40
codegen_flags: <defaults>
</compile_context>

<pallas_src>
import jax
import jax.numpy as jnp
from jax.experimental import pallas as pl
from jax.experimental.pallas import tpu as pltpu


def _fc_kernel(x_ref, wt_ref, b_ref, o_ref):
    """Single-step FC: everything (x, W.T, bias, out) resident in VMEM.

    One MXU matmul with f32 accumulation; bias folded into the same store.
    """
    o_ref[...] = (
        jnp.dot(x_ref[...], wt_ref[...], preferred_element_type=jnp.float32)
        + b_ref[...]
    ).astype(o_ref.dtype)


def prepare_fc_params(weight, bias, compute_dtype=jnp.bfloat16):
    """One-time (init-time) prep: pre-transpose W (N,K)->(K,N) and cast to bf16.

    Doing the transpose/cast here (instead of inside the per-call path) avoids
    materializing a full HBM copy of W on every forward call and halves the
    dominant W HBM traffic.
    """
    return weight.T.astype(compute_dtype), bias.astype(jnp.float32)


def fc_forward(x_flat, wt, bias):
    """Pallas linear layer: x_flat (B,K) @ wt (K,N) + bias (N,) -> (B,N) f32."""
    B, K = x_flat.shape
    K_w, N = wt.shape
    assert K == K_w
    b2 = bias.reshape(1, N).astype(jnp.float32)

    # Whole problem fits VMEM on all generations (x: B*K, W.T bf16: K*N*2 =
    # 128 KiB at these shapes, out: B*N), so use a single grid step: no K
    # reduction loop, no accumulator scratch, no per-step pipeline overhead.
    # TODO(synk): if K/N ever grow past VMEM, reintroduce a K grid (largest
    #   tk that fits the scoped-VMEM budget, double-buffered) and a parallel
    #   N axis (multiples of 256) so v7x's second TensorCore can be used.
    return pl.pallas_call(
        _fc_kernel,
        out_shape=jax.ShapeDtypeStruct((B, N), jnp.float32),
        grid=(1,),
        in_specs=[
            pl.BlockSpec((B, K), lambda i: (0, 0)),   # x (full, resident)
            pl.BlockSpec((K, N), lambda i: (0, 0)),   # W.T (full, resident)
            pl.BlockSpec((1, N), lambda i: (0, 0)),   # bias (full, resident)
        ],
        out_specs=pl.BlockSpec((B, N), lambda i: (0, 0)),
        compiler_params=pltpu.CompilerParams(
            dimension_semantics=("arbitrary",),
        ),
    )(x_flat, wt, b2)


def net_forward(x_nchw, wt, bias):
    """Net.forward: output = model(x)[0] (identity stand-in); fc(flatten)."""
    feat = x_nchw                                   # stand-in for self.model(x)[0]
    B = feat.shape[0]
    # Row-major flatten over (C, H, W) == PyTorch `output.view(B, -1)`.
    x_flat = feat.reshape(B, -1).astype(wt.dtype)   # bf16 activations for MXU
    return fc_forward(x_flat, wt, bias)


if __name__ == "__main__":
    # Small shapes consistent with the module's forward:
    #   backbone feature map (B, C, H, W) = (2, 32, 4, 4) -> in_features = 512
    #   label_size (N) = 128
    B, C, H, W = 2, 32, 4, 4
    N = 128
    K = C * H * W

    key = jax.random.PRNGKey(0)
    kx, kw, kb = jax.random.split(key, 3)

    x = jax.random.normal(kx, (B, C, H, W), dtype=jnp.float32)
    # Deterministic "nn.Linear"-style init (uniform in +/- 1/sqrt(K)).
    bound = 1.0 / (K ** 0.5)
    weight = jax.random.uniform(kw, (N, K), minval=-bound, maxval=bound,
                                dtype=jnp.float32)
    bias = jax.random.uniform(kb, (N,), minval=-bound, maxval=bound,
                              dtype=jnp.float32)

    # One-time parameter prep (transpose + bf16 cast), outside the hot path.
    wt_bf16, bias_f32 = prepare_fc_params(weight, bias)

    y = net_forward(x, wt_bf16, bias_f32)
    jax.block_until_ready(y)

    # Reference with the same bf16-cast operands (bf16 products are exact in
    # f32; only accumulation order differs).
    x_flat_bf = x.reshape(B, -1).astype(jnp.bfloat16)
    y_ref = x_flat_bf.astype(jnp.float32) @ wt_bf16.astype(jnp.float32) + bias_f32

    assert y.shape == (B, N)
    assert jnp.allclose(y, y_ref, atol=1e-2, rtol=1e-2), float(
        jnp.max(jnp.abs(y - y_ref)))

    print("KERNEL_OK")
</pallas_src>

<mosaic_0001>
module attributes {stable_mosaic.version = 11 : i64} {
  func.func @_fc_kernel(%arg0: i32, %arg1: memref<2x512xbf16, #tpu.memory_space<vmem>>, %arg2: memref<512x128xbf16, #tpu.memory_space<vmem>>, %arg3: memref<1x128xf32, #tpu.memory_space<vmem>>, %arg4: memref<2x128xf32, #tpu.memory_space<vmem>>) attributes {dimension_semantics = [#tpu.dimension_semantics<arbitrary>], iteration_bounds = array<i64: 1>, scalar_prefetch = 0 : i64, scratch_operands = 0 : i64, tpu.core_type = #tpu.core_type<tc>, window_params = [{pipeline_mode = #tpu.pipeline_mode<synchronous>, transform_indices = @transform_0, window_bounds = array<i64: 2, 512>}, {pipeline_mode = #tpu.pipeline_mode<synchronous>, transform_indices = @transform_1, window_bounds = array<i64: 512, 128>}, {pipeline_mode = #tpu.pipeline_mode<synchronous>, transform_indices = @transform_2, window_bounds = array<i64: 1, 128>}, {pipeline_mode = #tpu.pipeline_mode<synchronous>, transform_indices = @transform_3, window_bounds = array<i64: 2, 128>}]} {
    %c0 = arith.constant 0 : index
    %c0_0 = arith.constant 0 : index
    %0 = vector.load %arg1[%c0, %c0_0] : memref<2x512xbf16, #tpu.memory_space<vmem>>, vector<2x512xbf16>
    %c0_1 = arith.constant 0 : index
    %c0_2 = arith.constant 0 : index
    %1 = vector.load %arg2[%c0_1, %c0_2] : memref<512x128xbf16, #tpu.memory_space<vmem>>, vector<512x128xbf16>
    %cst = arith.constant dense<0.000000e+00> : vector<2x128xf32>
    %2 = tpu.matmul %0, %1, %cst {dimension_numbers = #tpu.dot_dimension_numbers<[1], [0], [0], [1], [0, 0, 1, 1], [], []>} : vector<2x512xbf16>, vector<512x128xbf16>, vector<2x128xf32> -> vector<2x128xf32>
    %c0_3 = arith.constant 0 : index
    %c0_4 = arith.constant 0 : index
    %3 = vector.load %arg3[%c0_3, %c0_4] : memref<1x128xf32, #tpu.memory_space<vmem>>, vector<1x128xf32>
    %4 = vector.broadcast %3 : vector<1x128xf32> to vector<2x128xf32>
    %5 = arith.addf %2, %4 : vector<2x128xf32>
    %c0_5 = arith.constant 0 : index
    %c0_6 = arith.constant 0 : index
    %6 = vector.load %arg4[%c0_5, %c0_6] : memref<2x128xf32, #tpu.memory_space<vmem>>, vector<2x128xf32>
    tpu.vector_store %arg4[%c0_5, %c0_6], %5 {strides = array<i32>} : memref<2x128xf32, #tpu.memory_space<vmem>>, vector<2x128xf32>,
    return
  }
  func.func @transform_0(%arg0: i32) -> (i32, i32) {
    %c0_i32 = arith.constant 0 : i32
    %c0_i32_0 = arith.constant 0 : i32
    %c0_i32_1 = arith.constant 0 : i32
    return %c0_i32, %c0_i32_0 : i32, i32
  }
  func.func @transform_1(%arg0: i32) -> (i32, i32) {
    %c0_i32 = arith.constant 0 : i32
    %c0_i32_0 = arith.constant 0 : i32
    %c0_i32_1 = arith.constant 0 : i32
    return %c0_i32, %c0_i32_0 : i32, i32
  }
  func.func @transform_2(%arg0: i32) -> (i32, i32) {
    %c0_i32 = arith.constant 0 : i32
    %c0_i32_0 = arith.constant 0 : i32
    %c0_i32_1 = arith.constant 0 : i32
    return %c0_i32, %c0_i32_0 : i32, i32
  }
  func.func @transform_3(%arg0: i32) -> (i32, i32) {
    %c0_i32 = arith.constant 0 : i32
    %c0_i32_0 = arith.constant 0 : i32
    %c0_i32_1 = arith.constant 0 : i32
    return %c0_i32, %c0_i32_0 : i32, i32
  }
}

</mosaic_0001>

<llo_original>
// kernel: tpu_custom_call.1
$region0: #{tpu_custom_call.1}
  #allocation0 [shape = 'u32[]', space=smem, size = 0x4, offset = 0x4, fixed_abs, tag = 'smem constant byte address 0x4 - core index']
  #allocation1 [shape = 'u32[72,128]{1,0:T(1,128)}', space=vmem, size = 0x9000, scoped, tag = 'internal scratch']
  %s0 = inlined_call_operand.hbm [shape: bf16[2,512], index: 0, kind: input, shape index: {}]
  %s1 = inlined_call_operand.hbm [shape: bf16[512,128], index: 1, kind: input, shape index: {}]
  %s2 = inlined_call_operand.vmem [shape: f32[1,128], index: 2, kind: input, shape index: {}]
  %s3 = inlined_call_operand.hbm [shape: f32[2,128], index: 3, kind: output, shape index: {}]
  %s4 = sld [smem:[#allocation0]]
  $region30: #{tpu_custom_call.1} parent=0
    _
  %s6 = ssub.s32 1, %s4
  %s7 = scalar_select 0, %s6, %s4
  $region1: #{tpu_custom_call.1} parent=0
    #allocation2 [shape = 'u8[2048]{0}', space=vmem, size = 0x800, scoped, tag = 'input window, operand 0, single buffered']
    #allocation3 [shape = 's32[1]{0}', space=sflag, size = 0x4, scoped, tag = 'scoped memory for tpu_custom_call.1']
    #allocation4 [shape = 's32[1]{0}', space=sflag, size = 0x4, scoped, tag = 'scoped memory for tpu_custom_call.1']
    #allocation5 [shape = 'u8[131072]{0}', space=vmem, size = 0x20000, scoped, tag = 'input window, operand 1, single buffered']
    #allocation6 [shape = 's32[1]{0}', space=sflag, size = 0x4, scoped, tag = 'scoped memory for tpu_custom_call.1']
    #allocation7 [shape = 'u8[1024]{0}', space=vmem, size = 0x400, scoped, tag = 'output window, operand 0, single buffered']
    %8 = vsyncpa [#allocation3], 0
    %9 = vsyncpa [#allocation6], 0
    %10 = vsyncpa [#allocation4], 0
    // Predicated region
    $region2: #{tpu_custom_call.1} parent=1 // pred_check
      _
    $region3: #{tpu_custom_call.1} parent=1 // pred_check_branch
      %12 = sbr.rel (0) target = $region5
    $region4: #{tpu_custom_call.1} parent=1 // pred_region
      %14 = vsyncadd [#allocation3], 0
      %s16 = sshll.u32 %s0, 4
      %s17 = int_to_ptr.hbm [resolvable:$true] %s16
      %s18 = sshll.u32 [#allocation2], 4
      %s19 = int_to_ptr.vmem [resolvable:$true] %s18
      %21 = dma.hbm_to_vmem [thread:$0]  %s17, 64, %s19, [#allocation3]
    $region5: #{tpu_custom_call.1} parent=1 // pred_fallthru
      _
    // Predicated region
    $region6: #{tpu_custom_call.1} parent=1 // pred_check
      _
    $region7: #{tpu_custom_call.1} parent=1 // pred_check_branch
      %23 = sbr.rel (0) target = $region9
    $region8: #{tpu_custom_call.1} parent=1 // pred_region
      %25 = vsyncadd [#allocation6], 0
      %s26 = sshll.u32 %s1, 4
      %s27 = int_to_ptr.hbm [resolvable:$true] %s26
      %s28 = sshll.u32 [#allocation5], 4
      %s29 = int_to_ptr.vmem [resolvable:$true] %s28
      %34 = dma.hbm_to_vmem [thread:$0]  %s27, 4096, %s29, [#allocation6], 64, 64, 4
    $region9: #{tpu_custom_call.1} parent=1 // pred_fallthru
      _
    // Predicated region
    $region10: #{tpu_custom_call.1} parent=1 // pred_check
      _
    $region11: #{tpu_custom_call.1} parent=1 // pred_check_branch
      %36 = sbr.rel (0) target = $region13
    $region12: #{tpu_custom_call.1} parent=1 // pred_region
      _
    $region13: #{tpu_custom_call.1} parent=1 // pred_fallthru
      _
    // Predicated region
    $region14: #{tpu_custom_call.1} parent=1 // pred_check
      _
    $region15: #{tpu_custom_call.1} parent=1 // pred_check_branch
      %38 = sbr.rel (0) target = $region17
    $region16: #{tpu_custom_call.1} parent=1 // pred_region
      %40 = dma.done [#allocation3], 64
    $region17: #{tpu_custom_call.1} parent=1 // pred_fallthru
      _
    // Predicated region
    $region18: #{tpu_custom_call.1} parent=1 // pred_check
      _
    $region19: #{tpu_custom_call.1} parent=1 // pred_check_branch
      %42 = sbr.rel (0) target = $region21
    $region20: #{tpu_custom_call.1} parent=1 // pred_region
      %44 = dma.done [#allocation6], 4096
    $region21: #{tpu_custom_call.1} parent=1 // pred_fallthru
      _
    %v45 = vld [vmem:[#allocation2] sm:$0xf]
    %v46 = vld [vmem:[#allocation5] sm:$0xf]
    %v47 = vld [vmem:[#allocation5 + $0x4] sm:$0xf]
    %v48 = vld [vmem:[#allocation5 + $0x8] sm:$0xf]
    %v49 = vld [vmem:[#allocation5 + $0xc] sm:$0xf]
    %v50 = vld [vmem:[#allocation5 + $0x10] sm:$0xf]
    %v51 = vld [vmem:[#allocation5 + $0x14] sm:$0xf]
    %v52 = vld [vmem:[#allocation5 + $0x18] sm:$0xf]
    %v53 = vld [vmem:[#allocation5 + $0x1c] sm:$0xf]
    %v54 = vld [vmem:[#allocation5 + $0x20] sm:$0xf]
    %v55 = vld [vmem:[#allocation5 + $0x24] sm:$0xf]
    %v56 = vld [vmem:[#allocation5 + $0x28] sm:$0xf]
    %v57 = vld [vmem:[#allocation5 + $0x2c] sm:$0xf]
    %v58 = vld [vmem:[#allocation5 + $0x30] sm:$0xf]
    %v59 = vld [vmem:[#allocation5 + $0x34] sm:$0xf]
    %v60 = vld [vmem:[#allocation5 + $0x38] sm:$0xf]
    %v61 = vld [vmem:[#allocation5 + $0x3c] sm:$0xf]
    %v62 = vld [vmem:[#allocation5 + $0x40] sm:$0xf]
    %v63 = vld [vmem:[#allocation5 + $0x44] sm:$0xf]
    %v64 = vld [vmem:[#allocation5 + $0x48] sm:$0xf]
    %v65 = vld [vmem:[#allocation5 + $0x4c] sm:$0xf]
    %v66 = vld [vmem:[#allocation5 + $0x50] sm:$0xf]
    %v67 = vld [vmem:[#allocation5 + $0x54] sm:$0xf]
    %v68 = vld [vmem:[#allocation5 + $0x58] sm:$0xf]
    %v69 = vld [vmem:[#allocation5 + $0x5c] sm:$0xf]
    %v70 = vld [vmem:[#allocation5 + $0x60] sm:$0xf]
    %v71 = vld [vmem:[#allocation5 + $0x64] sm:$0xf]
    %v72 = vld [vmem:[#allocation5 + $0x68] sm:$0xf]
    %v73 = vld [vmem:[#allocation5 + $0x6c] sm:$0xf]
    %v74 = vld [vmem:[#allocation5 + $0x70] sm:$0xf]
    %v75 = vld [vmem:[#allocation5 + $0x74] sm:$0xf]
    %v76 = vld [vmem:[#allocation5 + $0x78] sm:$0xf]
    %v77 = vld [vmem:[#allocation5 + $0x7c] sm:$0xf]
    %v78 = vld [vmem:[#allocation5 + $0x80] sm:$0xf]
    %v79 = vld [vmem:[#allocation5 + $0x84] sm:$0xf]
    %v80 = vld [vmem:[#allocation5 + $0x88] sm:$0xf]
    %v81 = vld [vmem:[#allocation5 + $0x8c] sm:$0xf]
    %v82 = vld [vmem:[#allocation5 + $0x90] sm:$0xf]
    %v83 = vld [vmem:[#allocation5 + $0x94] sm:$0xf]
    %v84 = vld [vmem:[#allocation5 + $0x98] sm:$0xf]
    %v85 = vld [vmem:[#allocation5 + $0x9c] sm:$0xf]
    %v86 = vld [vmem:[#allocation5 + $0xa0] sm:$0xf]
    %v87 = vld [vmem:[#allocation5 + $0xa4] sm:$0xf]
    %v88 = vld [vmem:[#allocation5 + $0xa8] sm:$0xf]
    %v89 = vld [vmem:[#allocation5 + $0xac] sm:$0xf]
    %v90 = vld [vmem:[#allocation5 + $0xb0] sm:$0xf]
    %v91 = vld [vmem:[#allocation5 + $0xb4] sm:$0xf]
    %v92 = vld [vmem:[#allocation5 + $0xb8] sm:$0xf]
    %v93 = vld [vmem:[#allocation5 + $0xbc] sm:$0xf]
    %v94 = vld [vmem:[#allocation5 + $0xc0] sm:$0xf]
    %v95 = vld [vmem:[#allocation5 + $0xc4] sm:$0xf]
    %v96 = vld [vmem:[#allocation5 + $0xc8] sm:$0xf]
    %v97 = vld [vmem:[#allocation5 + $0xcc] sm:$0xf]
    %v98 = vld [vmem:[#allocation5 + $0xd0] sm:$0xf]
    %v99 = vld [vmem:[#allocation5 + $0xd4] sm:$0xf]
    %v100 = vld [vmem:[#allocation5 + $0xd8] sm:$0xf]
    %v101 = vld [vmem:[#allocation5 + $0xdc] sm:$0xf]
    %v102 = vld [vmem:[#allocation5 + $0xe0] sm:$0xf]
    %v103 = vld [vmem:[#allocation5 + $0xe4] sm:$0xf]
    %v104 = vld [vmem:[#allocation5 + $0xe8] sm:$0xf]
    %v105 = vld [vmem:[#allocation5 + $0xec] sm:$0xf]
    %v106 = vld [vmem:[#allocation5 + $0xf0] sm:$0xf]
    %v107 = vld [vmem:[#allocation5 + $0xf4] sm:$0xf]
    %v108 = vld [vmem:[#allocation5 + $0xf8] sm:$0xf]
    %v109 = vld [vmem:[#allocation5 + $0xfc] sm:$0xf]
    %v110 = vld [vmem:[%s2] sm:$0x1]
    %v112 = vperm.slane %v110, 0
    %115 = vst [vmem:[#allocation1] ss:$9 sm:$0xff] %v45
    %v116 = vld [vmem:[#allocation1] sm:$0xff]
    %v117 = vld [vmem:[#allocation1 + $0x9] sm:$0xff]
    %v118 = vld [vmem:[#allocation1 + $0x12] sm:$0xff]
    %v119 = vld [vmem:[#allocation1 + $0x1b] sm:$0xff]
    %v188 = vunpack.c.l.b16 %v46
    %v189 = vunpack.c.l.b16 %v47
    %v190 = vunpack.c.l.b16 %v48
    %v191 = vunpack.c.l.b16 %v49
    %v192 = vunpack.c.l.b16 %v50
    %v193 = vunpack.c.l.b16 %v51
    %v194 = vunpack.c.l.b16 %v52
    %v195 = vunpack.c.l.b16 %v53
    %v196 = vunpack.c.l.b16 %v54
    %v197 = vunpack.c.l.b16 %v55
    %v198 = vunpack.c.l.b16 %v56
    %v199 = vunpack.c.l.b16 %v57
    %v200 = vunpack.c.l.b16 %v58
    %v201 = vunpack.c.l.b16 %v59
    %v202 = vunpack.c.l.b16 %v60
    %v203 = vunpack.c.l.b16 %v61
    %v204 = vunpack.c.l.b16 %v62
    %v205 = vunpack.c.l.b16 %v63
    %v206 = vunpack.c.l.b16 %v64
    %v207 = vunpack.c.l.b16 %v65
    %v208 = vunpack.c.l.b16 %v66
    %v209 = vunpack.c.l.b16 %v67
    %v210 = vunpack.c.l.b16 %v68
    %v211 = vunpack.c.l.b16 %v69
    %v212 = vunpack.c.l.b16 %v70
    %v213 = vunpack.c.l.b16 %v71
    %v214 = vunpack.c.l.b16 %v72
    %v215 = vunpack.c.l.b16 %v73
    %v216 = vunpack.c.l.b16 %v74
    %v217 = vunpack.c.l.b16 %v75
    %v218 = vunpack.c.l.b16 %v76
    %v219 = vunpack.c.l.b16 %v77
    %v220 = vunpack.c.l.b16 %v78
    %v221 = vunpack.c.l.b16 %v79
    %v222 = vunpack.c.l.b16 %v80
    %v223 = vunpack.c.l.b16 %v81
    %v224 = vunpack.c.l.b16 %v82
    %v225 = vunpack.c.l.b16 %v83
    %v226 = vunpack.c.l.b16 %v84
    %v227 = vunpack.c.l.b16 %v85
    %v228 = vunpack.c.l.b16 %v86
    %v229 = vunpack.c.l.b16 %v87
    %v230 = vunpack.c.l.b16 %v88
    %v231 = vunpack.c.l.b16 %v89
    %v232 = vunpack.c.l.b16 %v90
    %v233 = vunpack.c.l.b16 %v91
    %v234 = vunpack.c.l.b16 %v92
    %v235 = vunpack.c.l.b16 %v93
    %v236 = vunpack.c.l.b16 %v94
    %v237 = vunpack.c.l.b16 %v95
    %v238 = vunpack.c.l.b16 %v96
    %v239 = vunpack.c.l.b16 %v97
    %v240 = vunpack.c.l.b16 %v98
    %v241 = vunpack.c.l.b16 %v99
    %v242 = vunpack.c.l.b16 %v100
    %v243 = vunpack.c.l.b16 %v101
    %v244 = vunpack.c.l.b16 %v102
    %v245 = vunpack.c.l.b16 %v103
    %v246 = vunpack.c.l.b16 %v104
    %v247 = vunpack.c.l.b16 %v105
    %v248 = vunpack.c.l.b16 %v106
    %v249 = vunpack.c.l.b16 %v107
    %v250 = vunpack.c.l.b16 %v108
    %v251 = vunpack.c.l.b16 %v109
    %v252 = vpack.c.b16 %v189, %v188
    %v253 = vpack.c.b16 %v191, %v190
    %v254 = vpack.c.b16 %v193, %v192
    %v255 = vpack.c.b16 %v195, %v194
    %v256 = vpack.c.b16 %v197, %v196
    %v257 = vpack.c.b16 %v199, %v198
    %v258 = vpack.c.b16 %v201, %v200
    %v259 = vpack.c.b16 %v203, %v202
    %v260 = vpack.c.b16 %v205, %v204
    %v261 = vpack.c.b16 %v207, %v206
    %v262 = vpack.c.b16 %v209, %v208
    %v263 = vpack.c.b16 %v211, %v210
    %v264 = vpack.c.b16 %v213, %v212
    %v265 = vpack.c.b16 %v215, %v214
    %v266 = vpack.c.b16 %v217, %v216
    %v267 = vpack.c.b16 %v219, %v218
    %v268 = vpack.c.b16 %v221, %v220
    %v269 = vpack.c.b16 %v223, %v222
    %v270 = vpack.c.b16 %v225, %v224
    %v271 = vpack.c.b16 %v227, %v226
    %v272 = vpack.c.b16 %v229, %v228
    %v273 = vpack.c.b16 %v231, %v230
    %v274 = vpack.c.b16 %v233, %v232
    %v275 = vpack.c.b16 %v235, %v234
    %v276 = vpack.c.b16 %v237, %v236
    %v277 = vpack.c.b16 %v239, %v238
    %v278 = vpack.c.b16 %v241, %v240
    %v279 = vpack.c.b16 %v243, %v242
    %v280 = vpack.c.b16 %v245, %v244
    %v281 = vpack.c.b16 %v247, %v246
    %v282 = vpack.c.b16 %v249, %v248
    %v283 = vpack.c.b16 %v251, %v250
    %316 = vmatpush.bf16.msra.mxu0 %v259
    %317 = vmatpush.bf16.msra.mxu0 %v258
    %318 = vmatpush.bf16.msra.mxu0 %v257
    %319 = vmatpush.bf16.msra.mxu0 %v256
    %320 = vmatpush.bf16.msra.mxu0 %v255
    %321 = vmatpush.bf16.msra.mxu0 %v254
    %322 = vmatpush.bf16.msra.mxu0 %v253
    %323 = vmatpush.bf16.msra.mxu0 %v252
    %324 = vmatmul.bf16.gmra.mxu0 %v116
    %v325 = vpop.f32.mrf.mxu0
    %v326 = vadd.f32 %v112, %v325
    %v327 = vpop.f32.mrf.mxu0
    %328 = vdwg.mxu0
    %329 = vmatpush.bf16.msra.mxu0 %v267
    %330 = vmatpush.bf16.msra.mxu0 %v266
    %331 = vmatpush.bf16.msra.mxu0 %v265
    %332 = vmatpush.bf16.msra.mxu0 %v264
    %333 = vmatpush.bf16.msra.mxu0 %v263
    %334 = vmatpush.bf16.msra.mxu0 %v262
    %335 = vmatpush.bf16.msra.mxu0 %v261
    %336 = vmatpush.bf16.msra.mxu0 %v260
    %337 = vmatmul.bf16.gmra.mxu0 %v117
    %v338 = vpop.f32.mrf.mxu0
    %v339 = vadd.f32 %v326, %v338
    %v340 = vpop.f32.mrf.mxu0
    %341 = vdwg.mxu0
    %342 = vmatpush.bf16.msra.mxu0 %v275
    %343 = vmatpush.bf16.msra.mxu0 %v274
    %344 = vmatpush.bf16.msra.mxu0 %v273
    %345 = vmatpush.bf16.msra.mxu0 %v272
    %346 = vmatpush.bf16.msra.mxu0 %v271
    %347 = vmatpush.bf16.msra.mxu0 %v270
    %348 = vmatpush.bf16.msra.mxu0 %v269
    %349 = vmatpush.bf16.msra.mxu0 %v268
    %350 = vmatmul.bf16.gmra.mxu0 %v118
    %v351 = vpop.f32.mrf.mxu0
    %v352 = vadd.f32 %v339, %v351
    %v353 = vpop.f32.mrf.mxu0
    %354 = vdwg.mxu0
    %355 = vmatpush.bf16.msra.mxu0 %v283
    %356 = vmatpush.bf16.msra.mxu0 %v282
    %357 = vmatpush.bf16.msra.mxu0 %v281
    %358 = vmatpush.bf16.msra.mxu0 %v280
    %359 = vmatpush.bf16.msra.mxu0 %v279
    %360 = vmatpush.bf16.msra.mxu0 %v278
    %361 = vmatpush.bf16.msra.mxu0 %v277
    %362 = vmatpush.bf16.msra.mxu0 %v276
    %363 = vmatmul.bf16.gmra.mxu0 %v119
    %v364 = vpop.f32.mrf.mxu0
    %v365 = vadd.f32 %v352, %v364
    %v366 = vpop.f32.mrf.mxu0
    %367 = vdwg.mxu0
    %368 = vst [vmem:[#allocation7] sm:$0x3] %v365
    // Predicated region
    $region22: #{tpu_custom_call.1} parent=1 // pred_check
      _
    $region23: #{tpu_custom_call.1} parent=1 // pred_check_branch
      %370 = sbr.rel (0) target = $region25
    $region24: #{tpu_custom_call.1} parent=1 // pred_region
      %372 = vsyncadd [#allocation4], 0
      %s374 = sshll.u32 [#allocation7], 4
      %s375 = int_to_ptr.vmem [resolvable:$true] %s374
      %s376 = sshll.u32 %s3, 4
      %s377 = int_to_ptr.hbm [resolvable:$true] %s376
      %379 = dma.vmem_to_hbm [thread:$0]  %s375, 32, %s377, [#allocation4]
    $region25: #{tpu_custom_call.1} parent=1 // pred_fallthru
      _
    // Predicated region
    $region26: #{tpu_custom_call.1} parent=1 // pred_check
      _
    $region27: #{tpu_custom_call.1} parent=1 // pred_check_branch
      %381 = sbr.rel (0) target = $region29
    $region28: #{tpu_custom_call.1} parent=1 // pred_region
      %383 = dma.done [#allocation4], 32
    $region29: #{tpu_custom_call.1} parent=1 // pred_fallthru
      _
    %384 = vsyncpa [#allocation3], 1
    %385 = vsyncpa [#allocation6], 1
    %386 = vsyncpa [#allocation4], 1

</llo_original>
